<compile_context>
chip_gen: v7x
topology: tpu7x:2x2x1
jax: 0.10.0
libtpu: 0.0.40
codegen_flags: <defaults>
</compile_context>

<pallas_src>
import functools

import jax
import jax.numpy as jnp
from jax import lax
from jax.experimental import pallas as pl
from jax.experimental.pallas import tpu as pltpu

_LANE = 128     # vreg lane width (last dim)
_SUBLANE = 8    # vreg sublane count (second-to-last dim)
_MAX_BATCH_TILE = 512


def _round_up(n, m):
    return ((n + m - 1) // m) * m


def _fused_mlp_kernel(x_ref, w_in_ref, b_in_ref, w_hid_ref, b_hid_ref,
                      w_out_ref, b_out_ref, o_ref, h_ref, *,
                      depth, compute_dtype):
    """Entire MLP for one batch tile; activation stays resident in VMEM."""
    # ---- input layer: Linear + ReLU (f32 accumulate, f32 epilogue) ----
    h = jnp.dot(x_ref[...].astype(compute_dtype), w_in_ref[...],
                preferred_element_type=jnp.float32)
    h_ref[...] = jnp.maximum(h + b_in_ref[...], 0.0)

    # ---- hidden layers: Linear + Dropout(p=0.0) (identity) + ReLU ----
    def layer(l, carry):
        y = jnp.dot(h_ref[...].astype(compute_dtype), w_hid_ref[l],
                    preferred_element_type=jnp.float32)
        h_ref[...] = jnp.maximum(y + b_hid_ref[l], 0.0)
        return carry

    if depth > 0:
        lax.fori_loop(0, depth, layer, 0, unroll=True)

    # ---- output layer: Linear, no activation ----
    y = jnp.dot(h_ref[...].astype(compute_dtype), w_out_ref[...],
                preferred_element_type=jnp.float32)
    o_ref[...] = (y + b_out_ref[...]).astype(o_ref.dtype)


def _pad2(a, rows, cols):
    return jnp.pad(a, ((0, rows - a.shape[0]), (0, cols - a.shape[1])))


def _pad_bias(b, cols):
    return jnp.pad(b.astype(jnp.float32), (0, cols - b.shape[0])).reshape(1, cols)


def mlp_simple_forward(params, x, *, compute_dtype=jnp.float32):
    """Forward: Linear+ReLU, depth x (Linear+Dropout(0)+ReLU), Linear."""
    w_in, b_in = params["input"]
    hidden = params["hidden"]
    w_out, b_out = params["output"]
    depth = len(hidden)

    batch, din = x.shape
    hdim = w_in.shape[1]
    dout = w_out.shape[1]

    dinp = _round_up(din, _LANE)
    hp = _round_up(hdim, _LANE)
    doutp = _round_up(dout, _LANE)

    # Batch tile: sublane-aligned, capped so per-tile activations stay small;
    # pad the batch to a whole number of tiles so every block is full
    # (unmasked vst, no partial-block handling).
    tile_b = min(_MAX_BATCH_TILE, _round_up(max(batch, _SUBLANE), _SUBLANE))
    bp = _round_up(max(batch, tile_b), tile_b)
    n_tiles = bp // tile_b

    # Zero-pad everything once, outside the kernel.  Weights are cast to the
    # MXU input dtype; biases stay f32 so the epilogue is a clean f32 VALU
    # path on all generations.
    x_p = _pad2(x, bp, dinp)
    w_in_p = _pad2(w_in, dinp, hp).astype(compute_dtype)
    b_in_p = _pad_bias(b_in, hp)
    if depth > 0:
        w_hid_p = jnp.stack(
            [_pad2(w, hp, hp).astype(compute_dtype) for (w, _) in hidden])
        b_hid_p = jnp.stack([_pad_bias(b, hp) for (_, b) in hidden])
    else:  # dummy (kernel skips the hidden loop when depth == 0)
        w_hid_p = jnp.zeros((1, hp, hp), compute_dtype)
        b_hid_p = jnp.zeros((1, 1, hp), jnp.float32)
    w_out_p = _pad2(w_out, hp, doutp).astype(compute_dtype)
    b_out_p = _pad_bias(b_out, doutp)

    hdepth = w_hid_p.shape[0]
    kernel = functools.partial(_fused_mlp_kernel, depth=depth,
                               compute_dtype=compute_dtype)

    out_p = pl.pallas_call(
        kernel,
        out_shape=jax.ShapeDtypeStruct((bp, doutp), jnp.float32),
        grid_spec=pltpu.PrefetchScalarGridSpec(
            num_scalar_prefetch=0,
            grid=(n_tiles,),
            in_specs=[
                pl.BlockSpec((tile_b, dinp), lambda i: (i, 0)),     # x tile
                pl.BlockSpec((dinp, hp), lambda i: (0, 0)),          # W_in
                pl.BlockSpec((1, hp), lambda i: (0, 0)),              # b_in
                pl.BlockSpec((hdepth, hp, hp), lambda i: (0, 0, 0)),  # W_hid
                pl.BlockSpec((hdepth, 1, hp), lambda i: (0, 0, 0)),   # b_hid
                pl.BlockSpec((hp, doutp), lambda i: (0, 0)),          # W_out
                pl.BlockSpec((1, doutp), lambda i: (0, 0)),           # b_out
            ],
            out_specs=pl.BlockSpec((tile_b, doutp), lambda i: (i, 0)),
            scratch_shapes=[pltpu.VMEM((tile_b, hp), jnp.float32)],
        ),
        compiler_params=pltpu.CompilerParams(
            dimension_semantics=("parallel",)),
    )(x_p, w_in_p, b_in_p, w_hid_p, b_hid_p, w_out_p, b_out_p)

    return out_p[:batch, :dout].astype(x.dtype)


def init_mlp_params(key, input_dim, output_dim, hidden_dim, depth,
                    dtype=jnp.float32):
    """Deterministic synthetic parameter init (matches module __init__ shapes).

    Weights stored [in_features, out_features] so the kernel computes
    y = x @ W + b directly (transposed from torch's [out, in])."""
    keys = jax.random.split(key, 2 * (depth + 2))
    ki = iter(range(len(keys)))

    def lin_init(kw, kb, fan_in, fan_out):
        # torch.nn.Linear default: U(-1/sqrt(fan_in), 1/sqrt(fan_in))
        bound = 1.0 / jnp.sqrt(jnp.asarray(fan_in, dtype))
        w = jax.random.uniform(kw, (fan_in, fan_out), dtype, -bound, bound)
        b = jax.random.uniform(kb, (fan_out,), dtype, -bound, bound)
        return w, b

    params = {}
    params["input"] = lin_init(keys[next(ki)], keys[next(ki)],
                               input_dim, hidden_dim)
    params["hidden"] = [
        lin_init(keys[next(ki)], keys[next(ki)], hidden_dim, hidden_dim)
        for _ in range(depth)
    ]
    params["output"] = lin_init(keys[next(ki)], keys[next(ki)],
                                hidden_dim, output_dim)
    return params


def _ref_forward(params, x):
    """Pure-JAX reference (same math; Dropout(p=0.0) is identity)."""
    w, b = params["input"]
    h = jnp.maximum(x @ w + b, 0.0)
    for (w, b) in params["hidden"]:
        h = jnp.maximum(h @ w + b, 0.0)
    w, b = params["output"]
    return h @ w + b


if __name__ == "__main__":
    key = jax.random.PRNGKey(0)

    # ---- case 1: small shapes, f32 (bit-faithful to the PyTorch module) ----
    input_dim, output_dim, hidden_dim, depth = 16, 8, 32, 2
    batch = 2
    k_params, k_x, k2_params, k2_x = jax.random.split(key, 4)
    params = init_mlp_params(k_params, input_dim, output_dim, hidden_dim, depth)
    x = jax.random.normal(k_x, (batch, input_dim), dtype=jnp.float32)
    ref = _ref_forward(params, x)

    out = jax.block_until_ready(mlp_simple_forward(params, x,
                                                   compute_dtype=jnp.float32))
    assert out.shape == (batch, output_dim)
    assert jnp.allclose(out, ref, atol=1e-5, rtol=1e-5)

    # bf16 MXU path (f32 accumulation + f32 epilogue): loose tolerance.
    out_bf16 = jax.block_until_ready(
        mlp_simple_forward(params, x, compute_dtype=jnp.bfloat16))
    assert out_bf16.shape == (batch, output_dim)
    assert bool(jnp.all(jnp.isfinite(out_bf16)))
    assert jnp.allclose(out_bf16, ref, atol=2e-1, rtol=2e-1)

    # ---- case 2: non-aligned dims + multi-tile batch grid, f32 ----
    params2 = init_mlp_params(k2_params, 48, 24, 160, 3)
    x2 = jax.random.normal(k2_x, (600, 48), dtype=jnp.float32)
    ref2 = _ref_forward(params2, x2)
    out2 = jax.block_until_ready(mlp_simple_forward(params2, x2,
                                                    compute_dtype=jnp.float32))
    assert out2.shape == (600, 24)
    assert jnp.allclose(out2, ref2, atol=1e-4, rtol=1e-4)

    print("KERNEL_OK")
</pallas_src>

<mosaic_0001>
module attributes {stable_mosaic.version = 11 : i64} {
  func.func @_fused_mlp_kernel(%arg0: i32, %arg1: memref<8x128xf32, #tpu.memory_space<vmem>>, %arg2: memref<128x128xf32, #tpu.memory_space<vmem>>, %arg3: memref<1x128xf32, #tpu.memory_space<vmem>>, %arg4: memref<2x128x128xf32, #tpu.memory_space<vmem>>, %arg5: memref<2x1x128xf32, #tpu.memory_space<vmem>>, %arg6: memref<128x128xf32, #tpu.memory_space<vmem>>, %arg7: memref<1x128xf32, #tpu.memory_space<vmem>>, %arg8: memref<8x128xf32, #tpu.memory_space<vmem>>, %arg9: memref<8x128xf32, #tpu.memory_space<vmem>>) attributes {dimension_semantics = [#tpu.dimension_semantics<parallel>], iteration_bounds = array<i64: 1>, scalar_prefetch = 0 : i64, scratch_operands = 1 : i64, tpu.core_type = #tpu.core_type<tc>, window_params = [{transform_indices = @transform_0, window_bounds = array<i64: 8, 128>}, {pipeline_mode = #tpu.pipeline_mode<synchronous>, transform_indices = @transform_1, window_bounds = array<i64: 128, 128>}, {pipeline_mode = #tpu.pipeline_mode<synchronous>, transform_indices = @transform_2, window_bounds = array<i64: 1, 128>}, {pipeline_mode = #tpu.pipeline_mode<synchronous>, transform_indices = @transform_3, window_bounds = array<i64: 2, 128, 128>}, {pipeline_mode = #tpu.pipeline_mode<synchronous>, transform_indices = @transform_4, window_bounds = array<i64: 2, 1, 128>}, {pipeline_mode = #tpu.pipeline_mode<synchronous>, transform_indices = @transform_5, window_bounds = array<i64: 128, 128>}, {pipeline_mode = #tpu.pipeline_mode<synchronous>, transform_indices = @transform_6, window_bounds = array<i64: 1, 128>}, {transform_indices = @transform_7, window_bounds = array<i64: 8, 128>}]} {
    %c0 = arith.constant 0 : index
    %c0_0 = arith.constant 0 : index
    %0 = vector.load %arg1[%c0, %c0_0] : memref<8x128xf32, #tpu.memory_space<vmem>>, vector<8x128xf32>
    %c0_1 = arith.constant 0 : index
    %c0_2 = arith.constant 0 : index
    %1 = vector.load %arg2[%c0_1, %c0_2] : memref<128x128xf32, #tpu.memory_space<vmem>>, vector<128x128xf32>
    %cst = arith.constant dense<0.000000e+00> : vector<8x128xf32>
    %2 = tpu.matmul %0, %1, %cst {dimension_numbers = #tpu.dot_dimension_numbers<[1], [0], [0], [1], [0, 0, 1, 1], [], []>} : vector<8x128xf32>, vector<128x128xf32>, vector<8x128xf32> -> vector<8x128xf32>
    %c0_3 = arith.constant 0 : index
    %c0_4 = arith.constant 0 : index
    %3 = vector.load %arg3[%c0_3, %c0_4] : memref<1x128xf32, #tpu.memory_space<vmem>>, vector<1x128xf32>
    %4 = vector.broadcast %3 : vector<1x128xf32> to vector<8x128xf32>
    %5 = arith.addf %2, %4 : vector<8x128xf32>
    %cst_5 = arith.constant 0.000000e+00 : f32
    %6 = vector.broadcast %cst_5 : f32 to vector<8x128xf32>
    %7 = arith.maximumf %5, %6 : vector<8x128xf32>
    %c0_6 = arith.constant 0 : index
    %c0_7 = arith.constant 0 : index
    %8 = vector.load %arg9[%c0_6, %c0_7] : memref<8x128xf32, #tpu.memory_space<vmem>>, vector<8x128xf32>
    tpu.vector_store %arg9[%c0_6, %c0_7], %7 {strides = array<i32>} : memref<8x128xf32, #tpu.memory_space<vmem>>, vector<8x128xf32>,
    %c0_i32 = arith.constant 0 : i32
    %c0_8 = arith.constant 0 : index
    %c0_9 = arith.constant 0 : index
    %9 = vector.load %arg9[%c0_8, %c0_9] : memref<8x128xf32, #tpu.memory_space<vmem>>, vector<8x128xf32>
    %10 = arith.index_cast %c0_i32 : i32 to index
    %c0_10 = arith.constant 0 : index
    %c0_11 = arith.constant 0 : index
    %11 = vector.load %arg4[%10, %c0_10, %c0_11] : memref<2x128x128xf32, #tpu.memory_space<vmem>>, vector<1x128x128xf32>
    %12 = vector.shape_cast %11 : vector<1x128x128xf32> to vector<128x128xf32>
    %cst_12 = arith.constant dense<0.000000e+00> : vector<8x128xf32>
    %13 = tpu.matmul %9, %12, %cst_12 {dimension_numbers = #tpu.dot_dimension_numbers<[1], [0], [0], [1], [0, 0, 1, 1], [], []>} : vector<8x128xf32>, vector<128x128xf32>, vector<8x128xf32> -> vector<8x128xf32>
    %14 = arith.index_cast %c0_i32 : i32 to index
    %c0_13 = arith.constant 0 : index
    %c0_14 = arith.constant 0 : index
    %15 = vector.load %arg5[%14, %c0_13, %c0_14] : memref<2x1x128xf32, #tpu.memory_space<vmem>>, vector<1x1x128xf32>
    %16 = vector.shape_cast %15 : vector<1x1x128xf32> to vector<1x128xf32>
    %17 = vector.broadcast %16 : vector<1x128xf32> to vector<8x128xf32>
    %18 = arith.addf %13, %17 : vector<8x128xf32>
    %cst_15 = arith.constant 0.000000e+00 : f32
    %19 = vector.broadcast %cst_15 : f32 to vector<8x128xf32>
    %20 = arith.maximumf %18, %19 : vector<8x128xf32>
    %c0_16 = arith.constant 0 : index
    %c0_17 = arith.constant 0 : index
    %21 = vector.load %arg9[%c0_16, %c0_17] : memref<8x128xf32, #tpu.memory_space<vmem>>, vector<8x128xf32>
    tpu.vector_store %arg9[%c0_16, %c0_17], %20 {strides = array<i32>} : memref<8x128xf32, #tpu.memory_space<vmem>>, vector<8x128xf32>,
    %c1_i32 = arith.constant 1 : i32
    %c0_18 = arith.constant 0 : index
    %c0_19 = arith.constant 0 : index
    %22 = vector.load %arg9[%c0_18, %c0_19] : memref<8x128xf32, #tpu.memory_space<vmem>>, vector<8x128xf32>
    %23 = arith.index_cast %c1_i32 : i32 to index
    %c0_20 = arith.constant 0 : index
    %c0_21 = arith.constant 0 : index
    %24 = vector.load %arg4[%23, %c0_20, %c0_21] : memref<2x128x128xf32, #tpu.memory_space<vmem>>, vector<1x128x128xf32>
    %25 = vector.shape_cast %24 : vector<1x128x128xf32> to vector<128x128xf32>
    %cst_22 = arith.constant dense<0.000000e+00> : vector<8x128xf32>
    %26 = tpu.matmul %22, %25, %cst_22 {dimension_numbers = #tpu.dot_dimension_numbers<[1], [0], [0], [1], [0, 0, 1, 1], [], []>} : vector<8x128xf32>, vector<128x128xf32>, vector<8x128xf32> -> vector<8x128xf32>
    %27 = arith.index_cast %c1_i32 : i32 to index
    %c0_23 = arith.constant 0 : index
    %c0_24 = arith.constant 0 : index
    %28 = vector.load %arg5[%27, %c0_23, %c0_24] : memref<2x1x128xf32, #tpu.memory_space<vmem>>, vector<1x1x128xf32>
    %29 = vector.shape_cast %28 : vector<1x1x128xf32> to vector<1x128xf32>
    %30 = vector.broadcast %29 : vector<1x128xf32> to vector<8x128xf32>
    %31 = arith.addf %26, %30 : vector<8x128xf32>
    %cst_25 = arith.constant 0.000000e+00 : f32
    %32 = vector.broadcast %cst_25 : f32 to vector<8x128xf32>
    %33 = arith.maximumf %31, %32 : vector<8x128xf32>
    %c0_26 = arith.constant 0 : index
    %c0_27 = arith.constant 0 : index
    %34 = vector.load %arg9[%c0_26, %c0_27] : memref<8x128xf32, #tpu.memory_space<vmem>>, vector<8x128xf32>
    tpu.vector_store %arg9[%c0_26, %c0_27], %33 {strides = array<i32>} : memref<8x128xf32, #tpu.memory_space<vmem>>, vector<8x128xf32>,
    %c2_i32 = arith.constant 2 : i32
    %c0_28 = arith.constant 0 : index
    %c0_29 = arith.constant 0 : index
    %35 = vector.load %arg9[%c0_28, %c0_29] : memref<8x128xf32, #tpu.memory_space<vmem>>, vector<8x128xf32>
    %c0_30 = arith.constant 0 : index
    %c0_31 = arith.constant 0 : index
    %36 = vector.load %arg6[%c0_30, %c0_31] : memref<128x128xf32, #tpu.memory_space<vmem>>, vector<128x128xf32>
    %cst_32 = arith.constant dense<0.000000e+00> : vector<8x128xf32>
    %37 = tpu.matmul %35, %36, %cst_32 {dimension_numbers = #tpu.dot_dimension_numbers<[1], [0], [0], [1], [0, 0, 1, 1], [], []>} : vector<8x128xf32>, vector<128x128xf32>, vector<8x128xf32> -> vector<8x128xf32>
    %c0_33 = arith.constant 0 : index
    %c0_34 = arith.constant 0 : index
    %38 = vector.load %arg7[%c0_33, %c0_34] : memref<1x128xf32, #tpu.memory_space<vmem>>, vector<1x128xf32>
    %39 = vector.broadcast %38 : vector<1x128xf32> to vector<8x128xf32>
    %40 = arith.addf %37, %39 : vector<8x128xf32>
    %c0_35 = arith.constant 0 : index
    %c0_36 = arith.constant 0 : index
    %41 = vector.load %arg8[%c0_35, %c0_36] : memref<8x128xf32, #tpu.memory_space<vmem>>, vector<8x128xf32>
    tpu.vector_store %arg8[%c0_35, %c0_36], %40 {strides = array<i32>} : memref<8x128xf32, #tpu.memory_space<vmem>>, vector<8x128xf32>,
    return
  }
  func.func @transform_0(%arg0: i32) -> (i32, i32) {
    %c0_i32 = arith.constant 0 : i32
    %c0_i32_0 = arith.constant 0 : i32
    return %arg0, %c0_i32 : i32, i32
  }
  func.func @transform_1(%arg0: i32) -> (i32, i32) {
    %c0_i32 = arith.constant 0 : i32
    %c0_i32_0 = arith.constant 0 : i32
    %c0_i32_1 = arith.constant 0 : i32
    return %c0_i32, %c0_i32_0 : i32, i32
  }
  func.func @transform_2(%arg0: i32) -> (i32, i32) {
    %c0_i32 = arith.constant 0 : i32
    %c0_i32_0 = arith.constant 0 : i32
    %c0_i32_1 = arith.constant 0 : i32
    return %c0_i32, %c0_i32_0 : i32, i32
  }
  func.func @transform_3(%arg0: i32) -> (i32, i32, i32) {
    %c0_i32 = arith.constant 0 : i32
    %c0_i32_0 = arith.constant 0 : i32
    %c0_i32_1 = arith.constant 0 : i32
    %c0_i32_2 = arith.constant 0 : i32
    return %c0_i32, %c0_i32_0, %c0_i32_1 : i32, i32, i32
  }
  func.func @transform_4(%arg0: i32) -> (i32, i32, i32) {
    %c0_i32 = arith.constant 0 : i32
    %c0_i32_0 = arith.constant 0 : i32
    %c0_i32_1 = arith.constant 0 : i32
    %c0_i32_2 = arith.constant 0 : i32
    return %c0_i32, %c0_i32_0, %c0_i32_1 : i32, i32, i32
  }
  func.func @transform_5(%arg0: i32) -> (i32, i32) {
    %c0_i32 = arith.constant 0 : i32
    %c0_i32_0 = arith.constant 0 : i32
    %c0_i32_1 = arith.constant 0 : i32
    return %c0_i32, %c0_i32_0 : i32, i32
  }
  func.func @transform_6(%arg0: i32) -> (i32, i32) {
    %c0_i32 = arith.constant 0 : i32
    %c0_i32_0 = arith.constant 0 : i32
    %c0_i32_1 = arith.constant 0 : i32
    return %c0_i32, %c0_i32_0 : i32, i32
  }
  func.func @transform_7(%arg0: i32) -> (i32, i32) {
    %c0_i32 = arith.constant 0 : i32
    %c0_i32_0 = arith.constant 0 : i32
    return %arg0, %c0_i32 : i32, i32
  }
}

</mosaic_0001>

<llo_original>
// kernel: tpu_custom_call.1
$region0: #{tpu_custom_call.1}
  #allocation0 [shape = 'u32[]', space=smem, size = 0x4, offset = 0x4, fixed_abs, tag = 'smem constant byte address 0x4 - core index']
  #allocation1 [shape = 'u32[144,128]{1,0:T(1,128)}', space=vmem, size = 0x12000, scoped, tag = 'internal scratch']
  #allocation2 [shape = 'f32[8,128]{1,0:T(8,128)}', space=vmem, size = 0x1000, scoped, tag = 'scratch operand']
  %s0 = inlined_call_operand.hbm [shape: f32[8,128], index: 0, kind: input, shape index: {}]
  %s1 = inlined_call_operand.hbm [shape: f32[128,128], index: 1, kind: input, shape index: {}]
  %s2 = inlined_call_operand.vmem [shape: f32[1,128], index: 2, kind: input, shape index: {}]
  %s3 = inlined_call_operand.hbm [shape: f32[2,128,128], index: 3, kind: input, shape index: {}]
  %s4 = inlined_call_operand.vmem [shape: f32[2,1,128], index: 4, kind: input, shape index: {}]
  %s5 = inlined_call_operand.hbm [shape: f32[128,128], index: 5, kind: input, shape index: {}]
  %s6 = inlined_call_operand.vmem [shape: f32[1,128], index: 6, kind: input, shape index: {}]
  %s7 = inlined_call_operand.hbm [shape: f32[8,128], index: 7, kind: output, shape index: {}]
  %s8 = sld [smem:[#allocation0]]
  $region54: #{tpu_custom_call.1} parent=0
    _
  %s10 = ssub.s32 1, %s8
  %s11 = scalar_select 0, %s10, %s8
  $region1: #{tpu_custom_call.1} parent=0
    #allocation3 [shape = 'u8[4096]{0}', space=vmem, size = 0x1000, scoped, tag = 'input window, operand 0, single buffered']
    #allocation4 [shape = 's32[1]{0}', space=sflag, size = 0x4, scoped, tag = 'scoped memory for tpu_custom_call.1']
    #allocation5 [shape = 's32[1]{0}', space=sflag, size = 0x4, scoped, tag = 'scoped memory for tpu_custom_call.1']
    #allocation6 [shape = 'u8[65536]{0}', space=vmem, size = 0x10000, scoped, tag = 'input window, operand 1, single buffered']
    #allocation7 [shape = 's32[1]{0}', space=sflag, size = 0x4, scoped, tag = 'scoped memory for tpu_custom_call.1']
    #allocation8 [shape = 'u8[131072]{0}', space=vmem, size = 0x20000, scoped, tag = 'input window, operand 3, single buffered']
    #allocation9 [shape = 'u8[65536]{0}', space=vmem, size = 0x10000, scoped, tag = 'input window, operand 5, single buffered']
    #allocation10 [shape = 's32[1]{0}', space=sflag, size = 0x4, scoped, tag = 'scoped memory for tpu_custom_call.1']
    #allocation11 [shape = 'u8[4096]{0}', space=vmem, size = 0x1000, scoped, tag = 'output window, operand 0, single buffered']
    %12 = vsyncpa [#allocation4], 0
    %13 = vsyncpa [#allocation7], 0
    %14 = vsyncpa [#allocation10], 0
    %15 = vsyncpa [#allocation5], 0
    // Predicated region
    $region2: #{tpu_custom_call.1} parent=1 // pred_check
      _
    $region3: #{tpu_custom_call.1} parent=1 // pred_check_branch
      %17 = sbr.rel (0) target = $region5
    $region4: #{tpu_custom_call.1} parent=1 // pred_region
      %s19 = ssub.s32 128, 128
      %20 = vsyncadd [#allocation4], %s19
      %s22 = sshll.u32 [#allocation3], 4
      %s23 = int_to_ptr.vmem [resolvable:$true] %s22
      %25 = dma.hbm_to_vmem [thread:$0]  %s0, 128, %s23, [#allocation4]
    $region5: #{tpu_custom_call.1} parent=1 // pred_fallthru
      _
    // Predicated region
    $region6: #{tpu_custom_call.1} parent=1 // pred_check
      _
    $region7: #{tpu_custom_call.1} parent=1 // pred_check_branch
      %27 = sbr.rel (0) target = $region9
    $region8: #{tpu_custom_call.1} parent=1 // pred_region
      %s29 = ssub.s32 2048, 2048
      %30 = vsyncadd [#allocation7], %s29
      %s31 = sshll.u32 [#allocation6], 4
      %s32 = int_to_ptr.vmem [resolvable:$true] %s31
      %37 = dma.hbm_to_vmem [thread:$0]  %s1, 2048, %s32, [#allocation7], 128, 128, 8
    $region9: #{tpu_custom_call.1} parent=1 // pred_fallthru
      _
    // Predicated region
    $region10: #{tpu_custom_call.1} parent=1 // pred_check
      _
    $region11: #{tpu_custom_call.1} parent=1 // pred_check_branch
      %39 = sbr.rel (0) target = $region13
    $region12: #{tpu_custom_call.1} parent=1 // pred_region
      _
    $region13: #{tpu_custom_call.1} parent=1 // pred_fallthru
      _
    // Predicated region
    $region14: #{tpu_custom_call.1} parent=1 // pred_check
      _
    $region15: #{tpu_custom_call.1} parent=1 // pred_check_branch
      %41 = sbr.rel (0) target = $region17
    $region16: #{tpu_custom_call.1} parent=1 // pred_region
      %s43 = ssub.s32 4096, 4096
      %44 = vsyncadd [#allocation7], %s43
      %s45 = sshll.u32 [#allocation8], 4
      %s46 = int_to_ptr.vmem [resolvable:$true] %s45
      %51 = dma.hbm_to_vmem [thread:$0]  %s3, 4096, %s46, [#allocation7], 128, 128, 8
    $region17: #{tpu_custom_call.1} parent=1 // pred_fallthru
      _
    // Predicated region
    $region18: #{tpu_custom_call.1} parent=1 // pred_check
      _
    $region19: #{tpu_custom_call.1} parent=1 // pred_check_branch
      %53 = sbr.rel (0) target = $region21
    $region20: #{tpu_custom_call.1} parent=1 // pred_region
      _
    $region21: #{tpu_custom_call.1} parent=1 // pred_fallthru
      _
    // Predicated region
    $region22: #{tpu_custom_call.1} parent=1 // pred_check
      _
    $region23: #{tpu_custom_call.1} parent=1 // pred_check_branch
      %55 = sbr.rel (0) target = $region25
    $region24: #{tpu_custom_call.1} parent=1 // pred_region
      %s57 = ssub.s32 2048, 2048
      %58 = vsyncadd [#allocation10], %s57
      %s59 = sshll.u32 [#allocation9], 4
      %s60 = int_to_ptr.vmem [resolvable:$true] %s59
      %65 = dma.hbm_to_vmem [thread:$0]  %s5, 2048, %s60, [#allocation10], 128, 128, 8
    $region25: #{tpu_custom_call.1} parent=1 // pred_fallthru
      _
    // Predicated region
    $region26: #{tpu_custom_call.1} parent=1 // pred_check
      _
    $region27: #{tpu_custom_call.1} parent=1 // pred_check_branch
      %67 = sbr.rel (0) target = $region29
    $region28: #{tpu_custom_call.1} parent=1 // pred_region
      _
    $region29: #{tpu_custom_call.1} parent=1 // pred_fallthru
      _
    // Predicated region
    $region30: #{tpu_custom_call.1} parent=1 // pred_check
      _
    $region31: #{tpu_custom_call.1} parent=1 // pred_check_branch
      %69 = sbr.rel (0) target = $region33
    $region32: #{tpu_custom_call.1} parent=1 // pred_region
      %70 = dma.done [#allocation4], 128
    $region33: #{tpu_custom_call.1} parent=1 // pred_fallthru
      _
    // Predicated region
    $region34: #{tpu_custom_call.1} parent=1 // pred_check
      _
    $region35: #{tpu_custom_call.1} parent=1 // pred_check_branch
      %72 = sbr.rel (0) target = $region37
    $region36: #{tpu_custom_call.1} parent=1 // pred_region
      %73 = dma.done [#allocation7], 2048
    $region37: #{tpu_custom_call.1} parent=1 // pred_fallthru
      _
    // Predicated region
    $region38: #{tpu_custom_call.1} parent=1 // pred_check
      _
    $region39: #{tpu_custom_call.1} parent=1 // pred_check_branch
      %75 = sbr.rel (0) target = $region41
    $region40: #{tpu_custom_call.1} parent=1 // pred_region
      %76 = dma.done [#allocation7], 4096
    $region41: #{tpu_custom_call.1} parent=1 // pred_fallthru
      _
    // Predicated region
    $region42: #{tpu_custom_call.1} parent=1 // pred_check
      _
    $region43: #{tpu_custom_call.1} parent=1 // pred_check_branch
      %78 = sbr.rel (0) target = $region45
    $region44: #{tpu_custom_call.1} parent=1 // pred_region
      %79 = dma.done [#allocation10], 2048
    $region45: #{tpu_custom_call.1} parent=1 // pred_fallthru
      _
    %v80 = vld [vmem:[#allocation3] sm:$0xff]
    %v81 = vld [vmem:[#allocation6] sm:$0xff]
    %v82 = vld [vmem:[#allocation6 + $0x8] sm:$0xff]
    %v83 = vld [vmem:[#allocation6 + $0x10] sm:$0xff]
    %v84 = vld [vmem:[#allocation6 + $0x18] sm:$0xff]
    %v85 = vld [vmem:[#allocation6 + $0x20] sm:$0xff]
    %v86 = vld [vmem:[#allocation6 + $0x28] sm:$0xff]
    %v87 = vld [vmem:[#allocation6 + $0x30] sm:$0xff]
    %v88 = vld [vmem:[#allocation6 + $0x38] sm:$0xff]
    %v89 = vld [vmem:[#allocation6 + $0x40] sm:$0xff]
    %v90 = vld [vmem:[#allocation6 + $0x48] sm:$0xff]
    %v91 = vld [vmem:[#allocation6 + $0x50] sm:$0xff]
    %v92 = vld [vmem:[#allocation6 + $0x58] sm:$0xff]
    %v93 = vld [vmem:[#allocation6 + $0x60] sm:$0xff]
    %v94 = vld [vmem:[#allocation6 + $0x68] sm:$0xff]
    %v95 = vld [vmem:[#allocation6 + $0x70] sm:$0xff]
    %v96 = vld [vmem:[#allocation6 + $0x78] sm:$0xff]
    %v97 = vld [vmem:[%s2] sm:$0x1]
    %v99 = vlaneseq
    %v100 = vshrl.u32 %v99, 7
    %v101 = vsub.s32 0, %v100
    %v102 = vrot.slane %v97, %v101
    %104 = vmatprep.subr.mxu0 0.0
    %105 = vmatpush1.msra.mxu0 %v81
    %106 = vmatprep.subr.mxu0 0.0
    %107 = vmatpush1.msra.mxu0 %v82
    %108 = vmatprep.subr.mxu0 0.0
    %109 = vmatpush1.msra.mxu0 %v83
    %110 = vmatprep.subr.mxu0 0.0
    %111 = vmatpush1.msra.mxu0 %v84
    %112 = vmatprep.subr.mxu0 0.0
    %113 = vmatpush1.msra.mxu0 %v85
    %114 = vmatprep.subr.mxu0 0.0
    %115 = vmatpush1.msra.mxu0 %v86
    %116 = vmatprep.subr.mxu0 0.0
    %117 = vmatpush1.msra.mxu0 %v87
    %118 = vmatprep.subr.mxu0 0.0
    %119 = vmatpush1.msra.mxu0 %v88
    %120 = vmatprep.subr.mxu0 0.0
    %121 = vmatpush1.msra.mxu0 %v89
    %122 = vmatprep.subr.mxu0 0.0
    %123 = vmatpush1.msra.mxu0 %v90
    %124 = vmatprep.subr.mxu0 0.0
    %125 = vmatpush1.msra.mxu0 %v91
    %126 = vmatprep.subr.mxu0 0.0
    %127 = vmatpush1.msra.mxu0 %v92
    %128 = vmatprep.subr.mxu0 0.0
    %129 = vmatpush1.msra.mxu0 %v93
    %130 = vmatprep.subr.mxu0 0.0
    %131 = vmatpush1.msra.mxu0 %v94
    %132 = vmatprep.subr.mxu0 0.0
    %133 = vmatpush1.msra.mxu0 %v95
    %134 = vmatprep.subr.mxu0 0.0
    %135 = vmatpush1.msra.mxu0 %v96
    %136 = vmatprep.subr.mxu0 0.0
    %137 = vmatpush1.msra.mxu0 0.0
    %138 = vmatprep.subr.mxu0 0.0
    %139 = vmatpush1.msra.mxu0 0.0
    %140 = vmatprep.subr.mxu0 0.0
    %141 = vmatpush1.msra.mxu0 0.0
    %142 = vmatprep.subr.mxu0 0.0
    %143 = vmatpush1.msra.mxu0 0.0
    %144 = vmatprep.subr.mxu0 0.0
    %145 = vmatpush1.msra.mxu0 0.0
    %146 = vmatprep.subr.mxu0 0.0
    %147 = vmatpush1.msra.mxu0 0.0
    %148 = vmatprep.subr.mxu0 0.0
    %149 = vmatpush1.msra.mxu0 0.0
    %150 = vmatprep.subr.mxu0 0.0
    %151 = vmatpush1.msra.mxu0 0.0
    %152 = vmatprep.subr.mxu0 0.0
    %153 = vmatpush1.msra.mxu0 0.0
    %154 = vmatprep.subr.mxu0 0.0
    %155 = vmatpush1.msra.mxu0 0.0
    %156 = vmatprep.subr.mxu0 0.0
    %157 = vmatpush1.msra.mxu0 0.0
    %158 = vmatprep.subr.mxu0 0.0
    %159 = vmatpush1.msra.mxu0 0.0
    %160 = vmatprep.subr.mxu0 0.0
    %161 = vmatpush1.msra.mxu0 0.0
    %162 = vmatprep.subr.mxu0 0.0
    %163 = vmatpush1.msra.mxu0 0.0
    %164 = vmatprep.subr.mxu0 0.0
    %165 = vmatpush1.msra.mxu0 0.0
    %166 = vmatprep.subr.mxu0 0.0
    %167 = vmatpush1.msra.mxu0 0.0
    %168 = vmatprep.mubr.f32.mxu0 0.0
    %169 = vmatmul.mubr.f32.gmra.mrb[0].mxu0 %v80
    %v170 = vpop.f32.mrb[0].mxu0
    %v171 = vadd.f32 %v102, %v170
    %v172 = vpop.f32.mrb[0].mxu0
    %173 = vdwg.mxu0
    %v174 = vmax.f32 %v171, 0.0
    %175 = vst [vmem:[#allocation2] sm:$0xff] %v174
    %v176 = vld [vmem:[#allocation2] sm:$0xff]
    %v177 = vld [vmem:[#allocation8] sm:$0xff]
    %v178 = vld [vmem:[#allocation8 + $0x8] sm:$0xff]
    %v179 = vld [vmem:[#allocation8 + $0x10] sm:$0xff]
    %v180 = vld [vmem:[#allocation8 + $0x18] sm:$0xff]
    %v181 = vld [vmem:[#allocation8 + $0x20] sm:$0xff]
    %v182 = vld [vmem:[#allocation8 + $0x28] sm:$0xff]
    %v183 = vld [vmem:[#allocation8 + $0x30] sm:$0xff]
    %v184 = vld [vmem:[#allocation8 + $0x38] sm:$0xff]
    %v185 = vld [vmem:[#allocation8 + $0x40] sm:$0xff]
    %v186 = vld [vmem:[#allocation8 + $0x48] sm:$0xff]
    %v187 = vld [vmem:[#allocation8 + $0x50] sm:$0xff]
    %v188 = vld [vmem:[#allocation8 + $0x58] sm:$0xff]
    %v189 = vld [vmem:[#allocation8 + $0x60] sm:$0xff]
    %v190 = vld [vmem:[#allocation8 + $0x68] sm:$0xff]
    %v191 = vld [vmem:[#allocation8 + $0x70] sm:$0xff]
    %v192 = vld [vmem:[#allocation8 + $0x78] sm:$0xff]
    %v193 = vld [vmem:[%s4] sm:$0x1]
    %v195 = vlaneseq
    %v196 = vshrl.u32 %v195, 7
    %v197 = vsub.s32 0, %v196
    %v198 = vrot.slane %v193, %v197
    %200 = vmatprep.subr.mxu0 0.0
    %201 = vmatpush1.msra.mxu0 %v177
    %202 = vmatprep.subr.mxu0 0.0
    %203 = vmatpush1.msra.mxu0 %v178
    %204 = vmatprep.subr.mxu0 0.0
    %205 = vmatpush1.msra.mxu0 %v179
    %206 = vmatprep.subr.mxu0 0.0
    %207 = vmatpush1.msra.mxu0 %v180
    %208 = vmatprep.subr.mxu0 0.0
    %209 = vmatpush1.msra.mxu0 %v181
    %210 = vmatprep.subr.mxu0 0.0
    %211 = vmatpush1.msra.mxu0 %v182
    %212 = vmatprep.subr.mxu0 0.0
    %213 = vmatpush1.msra.mxu0 %v183
    %214 = vmatprep.subr.mxu0 0.0
    %215 = vmatpush1.msra.mxu0 %v184
    %216 = vmatprep.subr.mxu0 0.0
    %217 = vmatpush1.msra.mxu0 %v185
    %218 = vmatprep.subr.mxu0 0.0
    %219 = vmatpush1.msra.mxu0 %v186
    %220 = vmatprep.subr.mxu0 0.0
    %221 = vmatpush1.msra.mxu0 %v187
    %222 = vmatprep.subr.mxu0 0.0
    %223 = vmatpush1.msra.mxu0 %v188
    %224 = vmatprep.subr.mxu0 0.0
    %225 = vmatpush1.msra.mxu0 %v189
    %226 = vmatprep.subr.mxu0 0.0
    %227 = vmatpush1.msra.mxu0 %v190
    %228 = vmatprep.subr.mxu0 0.0
    %229 = vmatpush1.msra.mxu0 %v191
    %230 = vmatprep.subr.mxu0 0.0
    %231 = vmatpush1.msra.mxu0 %v192
    %232 = vmatprep.subr.mxu0 0.0
    %233 = vmatpush1.msra.mxu0 0.0
    %234 = vmatprep.subr.mxu0 0.0
    %235 = vmatpush1.msra.mxu0 0.0
    %236 = vmatprep.subr.mxu0 0.0
    %237 = vmatpush1.msra.mxu0 0.0
    %238 = vmatprep.subr.mxu0 0.0
    %239 = vmatpush1.msra.mxu0 0.0
    %240 = vmatprep.subr.mxu0 0.0
    %241 = vmatpush1.msra.mxu0 0.0
    %242 = vmatprep.subr.mxu0 0.0
    %243 = vmatpush1.msra.mxu0 0.0
    %244 = vmatprep.subr.mxu0 0.0
    %245 = vmatpush1.msra.mxu0 0.0
    %246 = vmatprep.subr.mxu0 0.0
    %247 = vmatpush1.msra.mxu0 0.0
    %248 = vmatprep.subr.mxu0 0.0
    %249 = vmatpush1.msra.mxu0 0.0
    %250 = vmatprep.subr.mxu0 0.0
    %251 = vmatpush1.msra.mxu0 0.0
    %252 = vmatprep.subr.mxu0 0.0
    %253 = vmatpush1.msra.mxu0 0.0
    %254 = vmatprep.subr.mxu0 0.0
    %255 = vmatpush1.msra.mxu0 0.0
    %256 = vmatprep.subr.mxu0 0.0
    %257 = vmatpush1.msra.mxu0 0.0
    %258 = vmatprep.subr.mxu0 0.0
    %259 = vmatpush1.msra.mxu0 0.0
    %260 = vmatprep.subr.mxu0 0.0
    %261 = vmatpush1.msra.mxu0 0.0
    %262 = vmatprep.subr.mxu0 0.0
    %263 = vmatpush1.msra.mxu0 0.0
    %264 = vmatprep.mubr.f32.mxu0 0.0
    %265 = vmatmul.mubr.f32.gmra.mrb[0].mxu0 %v176
    %v266 = vpop.f32.mrb[0].mxu0
    %v267 = vadd.f32 %v198, %v266
    %v268 = vpop.f32.mrb[0].mxu0
    %269 = vdwg.mxu0
    %v270 = vmax.f32 %v267, 0.0
    %271 = vst [vmem:[#allocation2] sm:$0xff] %v270
    %v272 = vld [vmem:[#allocation2] sm:$0xff]
    %s273 = scalar_lea.vmem [#allocation8], 128
    %v274 = vld [vmem:[%s273] sm:$0xff]
    %v275 = vld [vmem:[%s273 + $0x8] sm:$0xff]
    %v276 = vld [vmem:[%s273 + $0x10] sm:$0xff]
    %v277 = vld [vmem:[%s273 + $0x18] sm:$0xff]
    %v278 = vld [vmem:[%s273 + $0x20] sm:$0xff]
    %v279 = vld [vmem:[%s273 + $0x28] sm:$0xff]
    %v280 = vld [vmem:[%s273 + $0x30] sm:$0xff]
    %v281 = vld [vmem:[%s273 + $0x38] sm:$0xff]
    %v282 = vld [vmem:[%s273 + $0x40] sm:$0xff]
    %v283 = vld [vmem:[%s273 + $0x48] sm:$0xff]
    %v284 = vld [vmem:[%s273 + $0x50] sm:$0xff]
    %v285 = vld [vmem:[%s273 + $0x58] sm:$0xff]
    %v286 = vld [vmem:[%s273 + $0x60] sm:$0xff]
    %v287 = vld [vmem:[%s273 + $0x68] sm:$0xff]
    %v288 = vld [vmem:[%s273 + $0x70] sm:$0xff]
    %v289 = vld [vmem:[%s273 + $0x78] sm:$0xff]
    %s290 = scalar_lea.vmem %s4, 1
    %v291 = vld [vmem:[%s290] sm:$0x1]
    %v293 = vlaneseq
    %v294 = vshrl.u32 %v293, 7
    %v295 = vsub.s32 0, %v294
    %v296 = vrot.slane %v291, %v295
    %298 = vmatprep.subr.mxu0 0.0
    %299 = vmatpush1.msra.mxu0 %v274
    %300 = vmatprep.subr.mxu0 0.0
    %301 = vmatpush1.msra.mxu0 %v275
    %302 = vmatprep.subr.mxu0 0.0
    %303 = vmatpush1.msra.mxu0 %v276
    %304 = vmatprep.subr.mxu0 0.0
    %305 = vmatpush1.msra.mxu0 %v277
    %306 = vmatprep.subr.mxu0 0.0
    %307 = vmatpush1.msra.mxu0 %v278
    %308 = vmatprep.subr.mxu0 0.0
    %309 = vmatpush1.msra.mxu0 %v279
    %310 = vmatprep.subr.mxu0 0.0
    %311 = vmatpush1.msra.mxu0 %v280
    %312 = vmatprep.subr.mxu0 0.0
    %313 = vmatpush1.msra.mxu0 %v281
    %314 = vmatprep.subr.mxu0 0.0
    %315 = vmatpush1.msra.mxu0 %v282
    %316 = vmatprep.subr.mxu0 0.0
    %317 = vmatpush1.msra.mxu0 %v283
    %318 = vmatprep.subr.mxu0 0.0
    %319 = vmatpush1.msra.mxu0 %v284
    %320 = vmatprep.subr.mxu0 0.0
    %321 = vmatpush1.msra.mxu0 %v285
    %322 = vmatprep.subr.mxu0 0.0
    %323 = vmatpush1.msra.mxu0 %v286
    %324 = vmatprep.subr.mxu0 0.0
    %325 = vmatpush1.msra.mxu0 %v287
    %326 = vmatprep.subr.mxu0 0.0
    %327 = vmatpush1.msra.mxu0 %v288
    %328 = vmatprep.subr.mxu0 0.0
    %329 = vmatpush1.msra.mxu0 %v289
    %330 = vmatprep.subr.mxu0 0.0
    %331 = vmatpush1.msra.mxu0 0.0
    %332 = vmatprep.subr.mxu0 0.0
    %333 = vmatpush1.msra.mxu0 0.0
    %334 = vmatprep.subr.mxu0 0.0
    %335 = vmatpush1.msra.mxu0 0.0
    %336 = vmatprep.subr.mxu0 0.0
    %337 = vmatpush1.msra.mxu0 0.0
    %338 = vmatprep.subr.mxu0 0.0
    %339 = vmatpush1.msra.mxu0 0.0
    %340 = vmatprep.subr.mxu0 0.0
    %341 = vmatpush1.msra.mxu0 0.0
    %342 = vmatprep.subr.mxu0 0.0
    %343 = vmatpush1.msra.mxu0 0.0
    %344 = vmatprep.subr.mxu0 0.0
    %345 = vmatpush1.msra.mxu0 0.0
    %346 = vmatprep.subr.mxu0 0.0
    %347 = vmatpush1.msra.mxu0 0.0
    %348 = vmatprep.subr.mxu0 0.0
    %349 = vmatpush1.msra.mxu0 0.0
    %350 = vmatprep.subr.mxu0 0.0
    %351 = vmatpush1.msra.mxu0 0.0
    %352 = vmatprep.subr.mxu0 0.0
    %353 = vmatpush1.msra.mxu0 0.0
    %354 = vmatprep.subr.mxu0 0.0
    %355 = vmatpush1.msra.mxu0 0.0
    %356 = vmatprep.subr.mxu0 0.0
    %357 = vmatpush1.msra.mxu0 0.0
    %358 = vmatprep.subr.mxu0 0.0
    %359 = vmatpush1.msra.mxu0 0.0
    %360 = vmatprep.subr.mxu0 0.0
    %361 = vmatpush1.msra.mxu0 0.0
    %362 = vmatprep.mubr.f32.mxu0 0.0
    %363 = vmatmul.mubr.f32.gmra.mrb[0].mxu0 %v272
    %v364 = vpop.f32.mrb[0].mxu0
    %v365 = vadd.f32 %v296, %v364
    %v366 = vpop.f32.mrb[0].mxu0
    %367 = vdwg.mxu0
    %v368 = vmax.f32 %v365, 0.0
    %369 = vst [vmem:[#allocation2] sm:$0xff] %v368
    %v370 = vld [vmem:[#allocation2] sm:$0xff]
    %v371 = vld [vmem:[#allocation9] sm:$0xff]
    %v372 = vld [vmem:[#allocation9 + $0x8] sm:$0xff]
    %v373 = vld [vmem:[#allocation9 + $0x10] sm:$0xff]
    %v374 = vld [vmem:[#allocation9 + $0x18] sm:$0xff]
    %v375 = vld [vmem:[#allocation9 + $0x20] sm:$0xff]
    %v376 = vld [vmem:[#allocation9 + $0x28] sm:$0xff]
    %v377 = vld [vmem:[#allocation9 + $0x30] sm:$0xff]
    %v378 = vld [vmem:[#allocation9 + $0x38] sm:$0xff]
    %v379 = vld [vmem:[#allocation9 + $0x40] sm:$0xff]
    %v380 = vld [vmem:[#allocation9 + $0x48] sm:$0xff]
    %v381 = vld [vmem:[#allocation9 + $0x50] sm:$0xff]
    %v382 = vld [vmem:[#allocation9 + $0x58] sm:$0xff]
    %v383 = vld [vmem:[#allocation9 + $0x60] sm:$0xff]
    %v384 = vld [vmem:[#allocation9 + $0x68] sm:$0xff]
    %v385 = vld [vmem:[#allocation9 + $0x70] sm:$0xff]
    %v386 = vld [vmem:[#allocation9 + $0x78] sm:$0xff]
    %v387 = vld [vmem:[%s6] sm:$0x1]
    %v389 = vlaneseq
    %v390 = vshrl.u32 %v389, 7
    %v391 = vsub.s32 0, %v390
    %v392 = vrot.slane %v387, %v391
    %394 = vmatprep.subr.mxu0 0.0
    %395 = vmatpush1.msra.mxu0 %v371
    %396 = vmatprep.subr.mxu0 0.0
    %397 = vmatpush1.msra.mxu0 %v372
    %398 = vmatprep.subr.mxu0 0.0
    %399 = vmatpush1.msra.mxu0 %v373
    %400 = vmatprep.subr.mxu0 0.0
    %401 = vmatpush1.msra.mxu0 %v374
    %402 = vmatprep.subr.mxu0 0.0
    %403 = vmatpush1.msra.mxu0 %v375
    %404 = vmatprep.subr.mxu0 0.0
    %405 = vmatpush1.msra.mxu0 %v376
    %406 = vmatprep.subr.mxu0 0.0
    %407 = vmatpush1.msra.mxu0 %v377
    %408 = vmatprep.subr.mxu0 0.0
    %409 = vmatpush1.msra.mxu0 %v378
    %410 = vmatprep.subr.mxu0 0.0
    %411 = vmatpush1.msra.mxu0 %v379
    %412 = vmatprep.subr.mxu0 0.0
    %413 = vmatpush1.msra.mxu0 %v380
    %414 = vmatprep.subr.mxu0 0.0
    %415 = vmatpush1.msra.mxu0 %v381
    %416 = vmatprep.subr.mxu0 0.0
    %417 = vmatpush1.msra.mxu0 %v382
    %418 = vmatprep.subr.mxu0 0.0
    %419 = vmatpush1.msra.mxu0 %v383
    %420 = vmatprep.subr.mxu0 0.0
    %421 = vmatpush1.msra.mxu0 %v384
    %422 = vmatprep.subr.mxu0 0.0
    %423 = vmatpush1.msra.mxu0 %v385
    %424 = vmatprep.subr.mxu0 0.0
    %425 = vmatpush1.msra.mxu0 %v386
    %426 = vmatprep.subr.mxu0 0.0
    %427 = vmatpush1.msra.mxu0 0.0
    %428 = vmatprep.subr.mxu0 0.0
    %429 = vmatpush1.msra.mxu0 0.0
    %430 = vmatprep.subr.mxu0 0.0
    %431 = vmatpush1.msra.mxu0 0.0
    %432 = vmatprep.subr.mxu0 0.0
    %433 = vmatpush1.msra.mxu0 0.0
    %434 = vmatprep.subr.mxu0 0.0
    %435 = vmatpush1.msra.mxu0 0.0
    %436 = vmatprep.subr.mxu0 0.0
    %437 = vmatpush1.msra.mxu0 0.0
    %438 = vmatprep.subr.mxu0 0.0
    %439 = vmatpush1.msra.mxu0 0.0
    %440 = vmatprep.subr.mxu0 0.0
    %441 = vmatpush1.msra.mxu0 0.0
    %442 = vmatprep.subr.mxu0 0.0
    %443 = vmatpush1.msra.mxu0 0.0
    %444 = vmatprep.subr.mxu0 0.0
    %445 = vmatpush1.msra.mxu0 0.0
    %446 = vmatprep.subr.mxu0 0.0
    %447 = vmatpush1.msra.mxu0 0.0
    %448 = vmatprep.subr.mxu0 0.0
    %449 = vmatpush1.msra.mxu0 0.0
    %450 = vmatprep.subr.mxu0 0.0
    %451 = vmatpush1.msra.mxu0 0.0
    %452 = vmatprep.subr.mxu0 0.0
    %453 = vmatpush1.msra.mxu0 0.0
    %454 = vmatprep.subr.mxu0 0.0
    %455 = vmatpush1.msra.mxu0 0.0
    %456 = vmatprep.subr.mxu0 0.0
    %457 = vmatpush1.msra.mxu0 0.0
    %458 = vmatprep.mubr.f32.mxu0 0.0
    %459 = vmatmul.mubr.f32.gmra.mrb[0].mxu0 %v370
    %v460 = vpop.f32.mrb[0].mxu0
    %v461 = vadd.f32 %v392, %v460
    %v462 = vpop.f32.mrb[0].mxu0
    %463 = vdwg.mxu0
    %464 = vst [vmem:[#allocation11] sm:$0xff] %v461
    // Predicated region
    $region46: #{tpu_custom_call.1} parent=1 // pred_check
      _
    $region47: #{tpu_custom_call.1} parent=1 // pred_check_branch
      %466 = sbr.rel (0) target = $region49
    $region48: #{tpu_custom_call.1} parent=1 // pred_region
      %s468 = ssub.s32 128, 128
      %469 = vsyncadd [#allocation5], %s468
      %s471 = sshll.u32 [#allocation11], 4
      %s472 = int_to_ptr.vmem [resolvable:$true] %s471
      %474 = dma.vmem_to_hbm [thread:$0]  %s472, 128, %s7, [#allocation5]
    $region49: #{tpu_custom_call.1} parent=1 // pred_fallthru
      _
    // Predicated region
    $region50: #{tpu_custom_call.1} parent=1 // pred_check
      _
    $region51: #{tpu_custom_call.1} parent=1 // pred_check_branch
      %476 = sbr.rel (0) target = $region53
    $region52: #{tpu_custom_call.1} parent=1 // pred_region
      %477 = dma.done [#allocation5], 128
    $region53: #{tpu_custom_call.1} parent=1 // pred_fallthru
      _
    %478 = vsyncpa [#allocation4], 1
    %479 = vsyncpa [#allocation7], 1
    %480 = vsyncpa [#allocation10], 1
    %481 = vsyncpa [#allocation5], 1

</llo_original>
